<compile_context>
chip_gen: v6e
topology: v6e:2x2x1
jax: 0.10.0
libtpu: 0.0.40
codegen_flags: <defaults>
</compile_context>

<pallas_src>
import jax
import jax.numpy as jnp
from jax.experimental import pallas as pl
from jax.experimental.pallas import tpu as pltpu


def _round_up(x, m):
    return ((x + m - 1) // m) * m


def critic_twin_kernel(x_ref, w1_ref, w2_ref, w3_ref, b_ref, q_ref):
    """Transposed twin-Q MLP on one batch tile.

    x_ref  : (D, TB)    bf16   -- cat([state, action]) transposed
    w1_ref : (2H, D)    bf16   -- PyTorch (out, in) layout, heads stacked
    w2_ref : (2H, 2H)   bf16   -- block-diagonal (heads independent)
    w3_ref : (8, 2H)    bf16   -- rows 0/1 = w3a/w3b, rows 2..7 zero padding
    b_ref  : (2H, 3)    f32    -- col 0 = b1, col 1 = b2, col 2 rows 0..7 = b3
    q_ref  : (8, TB)    f32    -- row 0 = q1, row 1 = q2, rows 2..7 padding
    """
    x = x_ref[...]                                                   # (D, TB)

    # Layer 1: (2H, D) @ (D, TB) -> (2H, TB), f32 accumulation on the MXU.
    h = jnp.dot(w1_ref[...], x, preferred_element_type=jnp.float32)
    h = jnp.maximum(h + b_ref[:, 0:1], 0.0).astype(jnp.bfloat16)

    # Layer 2: block-diagonal fused weight keeps the two heads independent.
    g = jnp.dot(w2_ref[...], h, preferred_element_type=jnp.float32)
    g = jnp.maximum(g + b_ref[:, 1:2], 0.0).astype(jnp.bfloat16)

    # Layer 3: (8, 2H) @ (2H, TB) -> (8, TB); lane-dense store.
    q = jnp.dot(w3_ref[...], g, preferred_element_type=jnp.float32)
    q_ref[...] = q + b_ref[0:8, 2:3]


def critic_twin_forward(state, action, packed, *, max_batch_tile=1024):
    """Returns (q1, q2), each (B, 1) float32, matching PyTorch CriticTwin."""
    B = state.shape[0]
    D = state.shape[1] + action.shape[1]
    two_h = packed["w2"].shape[0]

    # Concatenate once in the wrapper (cheap) so layer 1 is a single dot,
    # then present batch on the lane (last) axis.
    x = jnp.concatenate([state, action], axis=-1).astype(jnp.bfloat16)   # (B, D)
    xT = jnp.transpose(x)                                                # (D, B)

    # Batch tile: multiple of 128 lanes; pad batch up to a tile multiple.
    TB = min(max_batch_tile, _round_up(B, 128))
    B_pad = _round_up(B, TB)
    if B_pad != B:
        xT = jnp.pad(xT, ((0, 0), (0, B_pad - B)))

    grid = (B_pad // TB,)
    vmem = pltpu.MemorySpace.VMEM

    flops = 2 * B_pad * (D * two_h + two_h * two_h + two_h * 8)
    bytes_accessed = (D * B_pad * 2                 # xT (bf16)
                      + two_h * D * 2 + two_h * two_h * 2 + 8 * two_h * 2
                      + two_h * 3 * 4               # bias (f32)
                      + 8 * B_pad * 4)              # qT (f32)

    qT = pl.pallas_call(
        critic_twin_kernel,
        out_shape=jax.ShapeDtypeStruct((8, B_pad), jnp.float32),
        grid=grid,
        in_specs=[
            pl.BlockSpec((D, TB), lambda i: (0, i), memory_space=vmem),
            pl.BlockSpec((two_h, D), lambda i: (0, 0), memory_space=vmem),
            pl.BlockSpec((two_h, two_h), lambda i: (0, 0), memory_space=vmem),
            pl.BlockSpec((8, two_h), lambda i: (0, 0), memory_space=vmem),
            pl.BlockSpec((two_h, 3), lambda i: (0, 0), memory_space=vmem),
        ],
        out_specs=pl.BlockSpec((8, TB), lambda i: (0, i), memory_space=vmem),
        compiler_params=pltpu.CompilerParams(
            dimension_semantics=("parallel",)),
        cost_estimate=pl.CostEstimate(
            flops=flops, transcendentals=0, bytes_accessed=bytes_accessed),
    )(xT, packed["w1"], packed["w2"], packed["w3"], packed["b"])

    # TODO(synk): for latency-critical B < ~32 inference a non-transposed,
    # gridless fast path would skip the pad-to-128-lanes; omitted for clarity.
    return qT[0, :B][:, None], qT[1, :B][:, None]


def init_raw_params(key, n_states, n_actions, hidden_units,
                    std=1.0, bias_const=1e-6):
    """Mirror reset_parameters: orthogonal weights (gain=std), constant bias.

    Weights are kept in PyTorch (out, in) layout.
    """
    D = n_states + n_actions
    H = hidden_units
    orth = jax.nn.initializers.orthogonal(scale=std)
    keys = jax.random.split(key, 6)

    def linear(k, fan_in, fan_out):
        w = orth(k, (fan_out, fan_in), jnp.float32)          # (out, in)
        return w, jnp.full((fan_out,), bias_const, jnp.float32)

    w1a, b1a = linear(keys[0], D, H)
    w2a, b2a = linear(keys[1], H, H)
    w3a, b3a = linear(keys[2], H, 1)
    w1b, b1b = linear(keys[3], D, H)
    w2b, b2b = linear(keys[4], H, H)
    w3b, b3b = linear(keys[5], H, 1)
    return dict(w1a=w1a, b1a=b1a, w2a=w2a, b2a=b2a, w3a=w3a, b3a=b3a,
                w1b=w1b, b1b=b1b, w2b=w2b, b2b=b2b, w3b=w3b, b3b=b3b)


def pack_params(p, dtype=jnp.bfloat16):
    """Fuse the twin heads: 3 wide bf16 weight matrices + one f32 bias slab."""
    H = p["w2a"].shape[0]
    w1 = jnp.concatenate([p["w1a"], p["w1b"]], axis=0)                 # (2H, D)
    w2 = jnp.zeros((2 * H, 2 * H), jnp.float32)
    w2 = w2.at[:H, :H].set(p["w2a"]).at[H:, H:].set(p["w2b"])          # block-diag
    w3 = jnp.zeros((8, 2 * H), jnp.float32)
    w3 = w3.at[0, :H].set(p["w3a"][0]).at[1, H:].set(p["w3b"][0])      # padded rows
    b = jnp.zeros((2 * H, 3), jnp.float32)
    b = (b.at[:H, 0].set(p["b1a"]).at[H:, 0].set(p["b1b"])
          .at[:H, 1].set(p["b2a"]).at[H:, 1].set(p["b2b"])
          .at[0, 2].set(p["b3a"][0]).at[1, 2].set(p["b3b"][0]))
    return dict(w1=w1.astype(dtype), w2=w2.astype(dtype),
                w3=w3.astype(dtype), b=b)


def reference_forward(state, action, p):
    """Pure-JAX f32 reference in the exact PyTorch formulation."""
    cat = jnp.concatenate([state, action], axis=-1)
    h = jax.nn.relu(cat @ p["w1a"].T + p["b1a"])
    h = jax.nn.relu(h @ p["w2a"].T + p["b2a"])
    q1 = h @ p["w3a"].T + p["b3a"]
    g = jax.nn.relu(cat @ p["w1b"].T + p["b1b"])
    g = jax.nn.relu(g @ p["w2b"].T + p["b2b"])
    q2 = g @ p["w3b"].T + p["b3b"]
    return q1, q2


def _check(q1, q2, q1_ref, q2_ref, B):
    assert q1.shape == (B, 1) and q2.shape == (B, 1)
    # bf16 operands (f32 accumulation): tolerance loosened vs. the f32 kernel.
    assert jnp.allclose(q1, q1_ref, atol=3e-2, rtol=3e-2), \
        f"q1 mismatch: {jnp.max(jnp.abs(q1 - q1_ref))}"
    assert jnp.allclose(q2, q2_ref, atol=3e-2, rtol=3e-2), \
        f"q2 mismatch: {jnp.max(jnp.abs(q2 - q2_ref))}"


if __name__ == "__main__":
    n_states, n_actions, hidden_units = 24, 8, 32

    key = jax.random.PRNGKey(0)
    k_param, k_state, k_action = jax.random.split(key, 3)

    raw = init_raw_params(k_param, n_states, n_actions, hidden_units)
    packed = pack_params(raw)

    # Small inference-style batch (single grid step).
    batch = 8
    state = jax.random.normal(k_state, (batch, n_states), jnp.float32)
    action = jax.random.normal(k_action, (batch, n_actions), jnp.float32)
    q1, q2 = critic_twin_forward(state, action, packed)
    jax.block_until_ready((q1, q2))
    q1_ref, q2_ref = reference_forward(state, action, raw)
    _check(q1, q2, q1_ref, q2_ref, batch)

    # Larger ragged batch exercising the multi-step batch grid + padding path.
    batch2 = 300
    k_state2, k_action2 = jax.random.split(jax.random.PRNGKey(1))
    state2 = jax.random.normal(k_state2, (batch2, n_states), jnp.float32)
    action2 = jax.random.normal(k_action2, (batch2, n_actions), jnp.float32)
    q1b, q2b = critic_twin_forward(state2, action2, packed, max_batch_tile=128)
    jax.block_until_ready((q1b, q2b))
    q1b_ref, q2b_ref = reference_forward(state2, action2, raw)
    _check(q1b, q2b, q1b_ref, q2b_ref, batch2)

    print("KERNEL_OK")
</pallas_src>

<mosaic_0001>
module attributes {stable_mosaic.version = 11 : i64} {
  func.func @critic_twin_kernel(%arg0: i32, %arg1: memref<32x128xbf16, #tpu.memory_space<vmem>>, %arg2: memref<64x32xbf16, #tpu.memory_space<vmem>>, %arg3: memref<64x64xbf16, #tpu.memory_space<vmem>>, %arg4: memref<8x64xbf16, #tpu.memory_space<vmem>>, %arg5: memref<64x3xf32, #tpu.memory_space<vmem>>, %arg6: memref<8x128xf32, #tpu.memory_space<vmem>>) attributes {dimension_semantics = [#tpu.dimension_semantics<parallel>], iteration_bounds = array<i64: 1>, scalar_prefetch = 0 : i64, scratch_operands = 0 : i64, tpu.core_type = #tpu.core_type<tc>, window_params = [{transform_indices = @transform_0, window_bounds = array<i64: 32, 128>}, {pipeline_mode = #tpu.pipeline_mode<synchronous>, transform_indices = @transform_1, window_bounds = array<i64: 64, 32>}, {pipeline_mode = #tpu.pipeline_mode<synchronous>, transform_indices = @transform_2, window_bounds = array<i64: 64, 64>}, {pipeline_mode = #tpu.pipeline_mode<synchronous>, transform_indices = @transform_3, window_bounds = array<i64: 8, 64>}, {pipeline_mode = #tpu.pipeline_mode<synchronous>, transform_indices = @transform_4, window_bounds = array<i64: 64, 3>}, {transform_indices = @transform_5, window_bounds = array<i64: 8, 128>}]} {
    %c0 = arith.constant 0 : index
    %c0_0 = arith.constant 0 : index
    %0 = vector.load %arg1[%c0, %c0_0] : memref<32x128xbf16, #tpu.memory_space<vmem>>, vector<32x128xbf16>
    %c0_1 = arith.constant 0 : index
    %c0_2 = arith.constant 0 : index
    %1 = vector.load %arg2[%c0_1, %c0_2] : memref<64x32xbf16, #tpu.memory_space<vmem>>, vector<64x32xbf16>
    %cst = arith.constant dense<0.000000e+00> : vector<64x128xf32>
    %2 = tpu.matmul %1, %0, %cst {dimension_numbers = #tpu.dot_dimension_numbers<[1], [0], [0], [1], [0, 0, 1, 1], [], []>} : vector<64x32xbf16>, vector<32x128xbf16>, vector<64x128xf32> -> vector<64x128xf32>
    %c0_3 = arith.constant 0 : index
    %c0_4 = arith.constant 0 : index
    %3 = vector.load %arg5[%c0_3, %c0_4] : memref<64x3xf32, #tpu.memory_space<vmem>>, vector<64x1xf32>
    %4 = vector.broadcast %3 : vector<64x1xf32> to vector<64x128xf32>
    %5 = arith.addf %2, %4 : vector<64x128xf32>
    %cst_5 = arith.constant 0.000000e+00 : f32
    %6 = vector.broadcast %cst_5 : f32 to vector<64x128xf32>
    %7 = arith.maximumf %5, %6 : vector<64x128xf32>
    %8 = arith.truncf %7 : vector<64x128xf32> to vector<64x128xbf16>
    %c0_6 = arith.constant 0 : index
    %c0_7 = arith.constant 0 : index
    %9 = vector.load %arg3[%c0_6, %c0_7] : memref<64x64xbf16, #tpu.memory_space<vmem>>, vector<64x64xbf16>
    %cst_8 = arith.constant dense<0.000000e+00> : vector<64x128xf32>
    %10 = tpu.matmul %9, %8, %cst_8 {dimension_numbers = #tpu.dot_dimension_numbers<[1], [0], [0], [1], [0, 0, 1, 1], [], []>} : vector<64x64xbf16>, vector<64x128xbf16>, vector<64x128xf32> -> vector<64x128xf32>
    %c0_9 = arith.constant 0 : index
    %c1 = arith.constant 1 : index
    %11 = vector.load %arg5[%c0_9, %c1] : memref<64x3xf32, #tpu.memory_space<vmem>>, vector<64x1xf32>
    %12 = vector.broadcast %11 : vector<64x1xf32> to vector<64x128xf32>
    %13 = arith.addf %10, %12 : vector<64x128xf32>
    %cst_10 = arith.constant 0.000000e+00 : f32
    %14 = vector.broadcast %cst_10 : f32 to vector<64x128xf32>
    %15 = arith.maximumf %13, %14 : vector<64x128xf32>
    %16 = arith.truncf %15 : vector<64x128xf32> to vector<64x128xbf16>
    %c0_11 = arith.constant 0 : index
    %c0_12 = arith.constant 0 : index
    %17 = vector.load %arg4[%c0_11, %c0_12] : memref<8x64xbf16, #tpu.memory_space<vmem>>, vector<8x64xbf16>
    %cst_13 = arith.constant dense<0.000000e+00> : vector<8x128xf32>
    %18 = tpu.matmul %17, %16, %cst_13 {dimension_numbers = #tpu.dot_dimension_numbers<[1], [0], [0], [1], [0, 0, 1, 1], [], []>} : vector<8x64xbf16>, vector<64x128xbf16>, vector<8x128xf32> -> vector<8x128xf32>
    %c0_14 = arith.constant 0 : index
    %c2 = arith.constant 2 : index
    %19 = vector.load %arg5[%c0_14, %c2] : memref<64x3xf32, #tpu.memory_space<vmem>>, vector<8x1xf32>
    %20 = vector.broadcast %19 : vector<8x1xf32> to vector<8x128xf32>
    %21 = arith.addf %18, %20 : vector<8x128xf32>
    %c0_15 = arith.constant 0 : index
    %c0_16 = arith.constant 0 : index
    %22 = vector.load %arg6[%c0_15, %c0_16] : memref<8x128xf32, #tpu.memory_space<vmem>>, vector<8x128xf32>
    tpu.vector_store %arg6[%c0_15, %c0_16], %21 {strides = array<i32>} : memref<8x128xf32, #tpu.memory_space<vmem>>, vector<8x128xf32>,
    return
  }
  func.func @transform_0(%arg0: i32) -> (i32, i32) {
    %c0_i32 = arith.constant 0 : i32
    %c0_i32_0 = arith.constant 0 : i32
    return %c0_i32, %arg0 : i32, i32
  }
  func.func @transform_1(%arg0: i32) -> (i32, i32) {
    %c0_i32 = arith.constant 0 : i32
    %c0_i32_0 = arith.constant 0 : i32
    %c0_i32_1 = arith.constant 0 : i32
    return %c0_i32, %c0_i32_0 : i32, i32
  }
  func.func @transform_2(%arg0: i32) -> (i32, i32) {
    %c0_i32 = arith.constant 0 : i32
    %c0_i32_0 = arith.constant 0 : i32
    %c0_i32_1 = arith.constant 0 : i32
    return %c0_i32, %c0_i32_0 : i32, i32
  }
  func.func @transform_3(%arg0: i32) -> (i32, i32) {
    %c0_i32 = arith.constant 0 : i32
    %c0_i32_0 = arith.constant 0 : i32
    %c0_i32_1 = arith.constant 0 : i32
    return %c0_i32, %c0_i32_0 : i32, i32
  }
  func.func @transform_4(%arg0: i32) -> (i32, i32) {
    %c0_i32 = arith.constant 0 : i32
    %c0_i32_0 = arith.constant 0 : i32
    %c0_i32_1 = arith.constant 0 : i32
    return %c0_i32, %c0_i32_0 : i32, i32
  }
  func.func @transform_5(%arg0: i32) -> (i32, i32) {
    %c0_i32 = arith.constant 0 : i32
    %c0_i32_0 = arith.constant 0 : i32
    return %c0_i32, %arg0 : i32, i32
  }
}

</mosaic_0001>

<llo_original>
// kernel: tpu_custom_call.1
$region0: #{tpu_custom_call.1}
  #allocation0 [shape = 'u32[]', space=smem, size = 0x4, offset = 0x4, fixed_abs, tag = 'smem constant byte address 0x4 - core index']
  #allocation1 [shape = 'u32[144,128]{1,0:T(1,128)}', space=vmem, size = 0x12000, scoped, tag = 'internal scratch']
  %s0 = inlined_call_operand.vmem [shape: bf16[32,128], index: 0, kind: input, shape index: {}]
  %s1 = inlined_call_operand.vmem [shape: bf16[64,32], index: 1, kind: input, shape index: {}]
  %s2 = inlined_call_operand.vmem [shape: bf16[64,64], index: 2, kind: input, shape index: {}]
  %s3 = inlined_call_operand.vmem [shape: bf16[8,64], index: 3, kind: input, shape index: {}]
  %s4 = inlined_call_operand.vmem [shape: f32[64,3], index: 4, kind: input, shape index: {}]
  %s5 = inlined_call_operand.hbm [shape: f32[8,128], index: 5, kind: output, shape index: {}]
  %s6 = sld [smem:[#allocation0]]
  $region30: #{tpu_custom_call.1} parent=0
    _
  %s8 = ssub.s32 1, %s6
  %s9 = scalar_select 0, %s8, %s6
  $region1: #{tpu_custom_call.1} parent=0
    #allocation2 [shape = 'u8[4096]{0}', space=vmem, size = 0x1000, scoped, tag = 'output window, operand 0, single buffered']
    #allocation3 [shape = 's32[1]{0}', space=sflag, size = 0x4, scoped, tag = 'scoped memory for tpu_custom_call.1']
    %10 = vsyncpa [#allocation3], 0
    // Predicated region
    $region2: #{tpu_custom_call.1} parent=1 // pred_check
      _
    $region3: #{tpu_custom_call.1} parent=1 // pred_check_branch
      %12 = sbr.rel (0) target = $region5
    $region4: #{tpu_custom_call.1} parent=1 // pred_region
      _
    $region5: #{tpu_custom_call.1} parent=1 // pred_fallthru
      _
    // Predicated region
    $region6: #{tpu_custom_call.1} parent=1 // pred_check
      _
    $region7: #{tpu_custom_call.1} parent=1 // pred_check_branch
      %14 = sbr.rel (0) target = $region9
    $region8: #{tpu_custom_call.1} parent=1 // pred_region
      _
    $region9: #{tpu_custom_call.1} parent=1 // pred_fallthru
      _
    // Predicated region
    $region10: #{tpu_custom_call.1} parent=1 // pred_check
      _
    $region11: #{tpu_custom_call.1} parent=1 // pred_check_branch
      %16 = sbr.rel (0) target = $region13
    $region12: #{tpu_custom_call.1} parent=1 // pred_region
      _
    $region13: #{tpu_custom_call.1} parent=1 // pred_fallthru
      _
    // Predicated region
    $region14: #{tpu_custom_call.1} parent=1 // pred_check
      _
    $region15: #{tpu_custom_call.1} parent=1 // pred_check_branch
      %18 = sbr.rel (0) target = $region17
    $region16: #{tpu_custom_call.1} parent=1 // pred_region
      _
    $region17: #{tpu_custom_call.1} parent=1 // pred_fallthru
      _
    // Predicated region
    $region18: #{tpu_custom_call.1} parent=1 // pred_check
      _
    $region19: #{tpu_custom_call.1} parent=1 // pred_check_branch
      %20 = sbr.rel (0) target = $region21
    $region20: #{tpu_custom_call.1} parent=1 // pred_region
      _
    $region21: #{tpu_custom_call.1} parent=1 // pred_fallthru
      _
    %v22 = vld [vmem:[%s0] sm:$0xf]
    %v23 = vld [vmem:[%s0 + $0x4] sm:$0xf]
    %v24 = vld [vmem:[%s0 + $0x8] sm:$0xf]
    %v25 = vld [vmem:[%s0 + $0xc] sm:$0xf]
    %v26 = vld [vmem:[%s1] sm:$0xf]
    %v27 = vld [vmem:[%s1 + $0x4] sm:$0xf]
    %v28 = vld [vmem:[%s1 + $0x8] sm:$0xf]
    %v29 = vld [vmem:[%s1 + $0xc] sm:$0xf]
    %v30 = vld [vmem:[%s1 + $0x10] sm:$0xf]
    %v31 = vld [vmem:[%s1 + $0x14] sm:$0xf]
    %v32 = vld [vmem:[%s1 + $0x18] sm:$0xf]
    %v33 = vld [vmem:[%s1 + $0x1c] sm:$0xf]
    %v34 = vld [vmem:[%s4] sm:$0xff]
    %v35 = vld [vmem:[%s4 + $0x8] sm:$0xff]
    %v36 = vld [vmem:[%s4 + $0x10] sm:$0xff]
    %v37 = vld [vmem:[%s4 + $0x18] sm:$0xff]
    %v38 = vld [vmem:[%s4 + $0x20] sm:$0xff]
    %v39 = vld [vmem:[%s4 + $0x28] sm:$0xff]
    %v40 = vld [vmem:[%s4 + $0x30] sm:$0xff]
    %v41 = vld [vmem:[%s4 + $0x38] sm:$0xff]
    %43 = vset.pattern.permute.xlu0 0
    %44 = vperm.xlu0 %43, %v34
    %v45 = vpop.permute.xlu0 %44
    %48 = vset.pattern.permute.xlu0 0
    %49 = vperm.xlu0 %48, %v35
    %v50 = vpop.permute.xlu0 %49
    %53 = vset.pattern.permute.xlu0 0
    %54 = vperm.xlu0 %53, %v36
    %v55 = vpop.permute.xlu0 %54
    %58 = vset.pattern.permute.xlu0 0
    %59 = vperm.xlu0 %58, %v37
    %v60 = vpop.permute.xlu0 %59
    %63 = vset.pattern.permute.xlu0 0
    %64 = vperm.xlu0 %63, %v38
    %v65 = vpop.permute.xlu0 %64
    %68 = vset.pattern.permute.xlu0 0
    %69 = vperm.xlu0 %68, %v39
    %v70 = vpop.permute.xlu0 %69
    %73 = vset.pattern.permute.xlu0 0
    %74 = vperm.xlu0 %73, %v40
    %v75 = vpop.permute.xlu0 %74
    %78 = vset.pattern.permute.xlu0 0
    %79 = vperm.xlu0 %78, %v41
    %v80 = vpop.permute.xlu0 %79
    %v90 = vunpack.c.l.b16 %v26
    %v91 = vunpack.c.l.b16 %v27
    %v92 = vunpack.c.l.b16 %v28
    %v93 = vunpack.c.l.b16 %v29
    %v94 = vunpack.c.l.b16 %v30
    %v95 = vunpack.c.l.b16 %v31
    %v96 = vunpack.c.l.b16 %v32
    %v97 = vunpack.c.l.b16 %v33
    %v98 = vpack.c.b16 %v91, %v90
    %v99 = vpack.c.b16 %v93, %v92
    %v100 = vpack.c.b16 %v95, %v94
    %v101 = vpack.c.b16 %v97, %v96
    %v106 = vunpack.c.l.b16 %v22
    %v107 = vunpack.c.l.b16 %v23
    %v108 = vunpack.c.l.b16 %v24
    %v109 = vunpack.c.l.b16 %v25
    %v110 = vpack.c.b16 %v107, %v106
    %v111 = vpack.c.b16 %v109, %v108
    %vm114 = vcmask 261120
    %v116 = vsel %vm114, %v98, 0
    %v119 = vsel %vm114, %v99, 0
    %v122 = vsel %vm114, %v100, 0
    %v125 = vsel %vm114, %v101, 0
    %127 = vmatprep.subr.bf16.mxu0 0
    %128 = vmatpush1.bf16.msra.mxu0 0
    %129 = vmatprep.subr.bf16.mxu0 0
    %130 = vmatpush1.bf16.msra.mxu0 0
    %131 = vmatprep.subr.bf16.mxu0 0
    %132 = vmatpush1.bf16.msra.mxu0 0
    %133 = vmatprep.subr.bf16.mxu0 0
    %134 = vmatpush1.bf16.msra.mxu0 0
    %135 = vmatprep.subr.bf16.mxu0 0
    %136 = vmatpush1.bf16.msra.mxu0 0
    %137 = vmatprep.subr.bf16.mxu0 0
    %138 = vmatpush1.bf16.msra.mxu0 0
    %139 = vmatprep.subr.bf16.mxu0 0
    %140 = vmatpush1.bf16.msra.mxu0 %v111
    %141 = vmatprep.subr.bf16.mxu0 0
    %142 = vmatpush1.bf16.msra.mxu0 %v110
    %143 = vmatprep.subr.bf16.mxu0 0
    %144 = vmatpush2.bf16.msra.mxu0 0
    %145 = vmatprep.subr.bf16.mxu0 0
    %146 = vmatpush2.bf16.msra.mxu0 0
    %147 = vmatprep.subr.bf16.mxu0 0
    %148 = vmatpush2.bf16.msra.mxu0 0
    %149 = vmatprep.subr.bf16.mxu0 0
    %150 = vmatpush2.bf16.msra.mxu0 0
    %151 = vmatprep.subr.bf16.mxu0 0
    %152 = vmatpush2.bf16.msra.mxu0 0
    %153 = vmatprep.subr.bf16.mxu0 0
    %154 = vmatpush2.bf16.msra.mxu0 0
    %155 = vmatprep.subr.bf16.mxu0 0
    %156 = vmatpush2.bf16.msra.mxu0 0
    %157 = vmatprep.subr.bf16.mxu0 0
    %158 = vmatpush2.bf16.msra.mxu0 0
    %159 = vmatprep.mubr.bf16.mxu0 0
    %160 = vmatmul.mubr.bf16.gmra.mxu0 %v116
    %v161 = vpop.f32.mrf.mxu0
    %v162 = vadd.f32 %v45, %v161
    %v163 = vpop.f32.mrf.mxu0
    %v164 = vpop.f32.mrf.mxu0
    %v165 = vadd.f32 %v50, %v164
    %v166 = vpop.f32.mrf.mxu0
    %167 = vmatprep.mubr.bf16.mxu0 0
    %168 = vmatmul.mubr.bf16.gmra.mxu0 %v119
    %v169 = vpop.f32.mrf.mxu0
    %v170 = vadd.f32 %v55, %v169
    %v171 = vpop.f32.mrf.mxu0
    %v172 = vpop.f32.mrf.mxu0
    %v173 = vadd.f32 %v60, %v172
    %v174 = vpop.f32.mrf.mxu0
    %175 = vmatprep.mubr.bf16.mxu0 0
    %176 = vmatmul.mubr.bf16.gmra.mxu0 %v122
    %v177 = vpop.f32.mrf.mxu0
    %v178 = vadd.f32 %v65, %v177
    %v179 = vpop.f32.mrf.mxu0
    %v180 = vpop.f32.mrf.mxu0
    %v181 = vadd.f32 %v70, %v180
    %v182 = vpop.f32.mrf.mxu0
    %183 = vmatprep.mubr.bf16.mxu0 0
    %184 = vmatmul.mubr.bf16.gmra.mxu0 %v125
    %v185 = vpop.f32.mrf.mxu0
    %v186 = vadd.f32 %v75, %v185
    %v187 = vpop.f32.mrf.mxu0
    %v188 = vpop.f32.mrf.mxu0
    %v189 = vadd.f32 %v80, %v188
    %v190 = vpop.f32.mrf.mxu0
    %191 = vdwg.mxu0
    %v192 = vmax.f32 %v162, 0.0
    %v193 = vmax.f32 %v165, 0.0
    %v194 = vmax.f32 %v170, 0.0
    %v195 = vmax.f32 %v173, 0.0
    %v196 = vmax.f32 %v178, 0.0
    %v197 = vmax.f32 %v181, 0.0
    %v198 = vmax.f32 %v186, 0.0
    %v199 = vmax.f32 %v189, 0.0
    %v200 = vpack.c.bf16 %v193, %v192
    %v201 = vpack.c.bf16 %v195, %v194
    %v202 = vpack.c.bf16 %v197, %v196
    %v203 = vpack.c.bf16 %v199, %v198
    %v204 = vld [vmem:[%s2] sm:$0xf]
    %v205 = vld [vmem:[%s2 + $0x4] sm:$0xf]
    %v206 = vld [vmem:[%s2 + $0x8] sm:$0xf]
    %v207 = vld [vmem:[%s2 + $0xc] sm:$0xf]
    %v208 = vld [vmem:[%s2 + $0x10] sm:$0xf]
    %v209 = vld [vmem:[%s2 + $0x14] sm:$0xf]
    %v210 = vld [vmem:[%s2 + $0x18] sm:$0xf]
    %v211 = vld [vmem:[%s2 + $0x1c] sm:$0xf]
    %212 = vset.pattern.permute.xlu0 1
    %213 = vperm.xlu0 %212, %v34
    %v214 = vpop.permute.xlu0 %213
    %216 = vset.pattern.permute.xlu0 1
    %217 = vperm.xlu0 %216, %v35
    %v218 = vpop.permute.xlu0 %217
    %220 = vset.pattern.permute.xlu0 1
    %221 = vperm.xlu0 %220, %v36
    %v222 = vpop.permute.xlu0 %221
    %224 = vset.pattern.permute.xlu0 1
    %225 = vperm.xlu0 %224, %v37
    %v226 = vpop.permute.xlu0 %225
    %228 = vset.pattern.permute.xlu0 1
    %229 = vperm.xlu0 %228, %v38
    %v230 = vpop.permute.xlu0 %229
    %232 = vset.pattern.permute.xlu0 1
    %233 = vperm.xlu0 %232, %v39
    %v234 = vpop.permute.xlu0 %233
    %236 = vset.pattern.permute.xlu0 1
    %237 = vperm.xlu0 %236, %v40
    %v238 = vpop.permute.xlu0 %237
    %240 = vset.pattern.permute.xlu0 1
    %241 = vperm.xlu0 %240, %v41
    %v242 = vpop.permute.xlu0 %241
    %v252 = vunpack.c.l.b16 %v204
    %v253 = vunpack.c.l.b16 %v205
    %v254 = vunpack.c.l.b16 %v206
    %v255 = vunpack.c.l.b16 %v207
    %v256 = vunpack.c.l.b16 %v208
    %v257 = vunpack.c.l.b16 %v209
    %v258 = vunpack.c.l.b16 %v210
    %v259 = vunpack.c.l.b16 %v211
    %v260 = vpack.c.b16 %v253, %v252
    %v261 = vpack.c.b16 %v255, %v254
    %v262 = vpack.c.b16 %v257, %v256
    %v263 = vpack.c.b16 %v259, %v258
    %vm264 = vcmask 523264
    %v266 = vsel %vm264, %v260, 0
    %v269 = vsel %vm264, %v261, 0
    %v272 = vsel %vm264, %v262, 0
    %v275 = vsel %vm264, %v263, 0
    %277 = vmatprep.subr.bf16.mxu0 0
    %278 = vmatpush1.bf16.msra.mxu0 0
    %279 = vmatprep.subr.bf16.mxu0 0
    %280 = vmatpush1.bf16.msra.mxu0 0
    %281 = vmatprep.subr.bf16.mxu0 0
    %282 = vmatpush1.bf16.msra.mxu0 0
    %283 = vmatprep.subr.bf16.mxu0 0
    %284 = vmatpush1.bf16.msra.mxu0 0
    %285 = vmatprep.subr.bf16.mxu0 0
    %286 = vmatpush1.bf16.msra.mxu0 %v203
    %287 = vmatprep.subr.bf16.mxu0 0
    %288 = vmatpush1.bf16.msra.mxu0 %v202
    %289 = vmatprep.subr.bf16.mxu0 0
    %290 = vmatpush1.bf16.msra.mxu0 %v201
    %291 = vmatprep.subr.bf16.mxu0 0
    %292 = vmatpush1.bf16.msra.mxu0 %v200
    %293 = vmatprep.subr.bf16.mxu0 0
    %294 = vmatpush2.bf16.msra.mxu0 0
    %295 = vmatprep.subr.bf16.mxu0 0
    %296 = vmatpush2.bf16.msra.mxu0 0
    %297 = vmatprep.subr.bf16.mxu0 0
    %298 = vmatpush2.bf16.msra.mxu0 0
    %299 = vmatprep.subr.bf16.mxu0 0
    %300 = vmatpush2.bf16.msra.mxu0 0
    %301 = vmatprep.subr.bf16.mxu0 0
    %302 = vmatpush2.bf16.msra.mxu0 0
    %303 = vmatprep.subr.bf16.mxu0 0
    %304 = vmatpush2.bf16.msra.mxu0 0
    %305 = vmatprep.subr.bf16.mxu0 0
    %306 = vmatpush2.bf16.msra.mxu0 0
    %307 = vmatprep.subr.bf16.mxu0 0
    %308 = vmatpush2.bf16.msra.mxu0 0
    %309 = vmatprep.mubr.bf16.mxu0 0
    %310 = vmatmul.mubr.bf16.gmra.mxu0 %v266
    %v311 = vpop.f32.mrf.mxu0
    %v312 = vadd.f32 %v214, %v311
    %v313 = vpop.f32.mrf.mxu0
    %v314 = vpop.f32.mrf.mxu0
    %v315 = vadd.f32 %v218, %v314
    %v316 = vpop.f32.mrf.mxu0
    %317 = vmatprep.mubr.bf16.mxu0 0
    %318 = vmatmul.mubr.bf16.gmra.mxu0 %v269
    %v319 = vpop.f32.mrf.mxu0
    %v320 = vadd.f32 %v222, %v319
    %v321 = vpop.f32.mrf.mxu0
    %v322 = vpop.f32.mrf.mxu0
    %v323 = vadd.f32 %v226, %v322
    %v324 = vpop.f32.mrf.mxu0
    %325 = vmatprep.mubr.bf16.mxu0 0
    %326 = vmatmul.mubr.bf16.gmra.mxu0 %v272
    %v327 = vpop.f32.mrf.mxu0
    %v328 = vadd.f32 %v230, %v327
    %v329 = vpop.f32.mrf.mxu0
    %v330 = vpop.f32.mrf.mxu0
    %v331 = vadd.f32 %v234, %v330
    %v332 = vpop.f32.mrf.mxu0
    %333 = vmatprep.mubr.bf16.mxu0 0
    %334 = vmatmul.mubr.bf16.gmra.mxu0 %v275
    %v335 = vpop.f32.mrf.mxu0
    %v336 = vadd.f32 %v238, %v335
    %v337 = vpop.f32.mrf.mxu0
    %v338 = vpop.f32.mrf.mxu0
    %v339 = vadd.f32 %v242, %v338
    %v340 = vpop.f32.mrf.mxu0
    %341 = vdwg.mxu0
    %v342 = vmax.f32 %v312, 0.0
    %v343 = vmax.f32 %v315, 0.0
    %v344 = vmax.f32 %v320, 0.0
    %v345 = vmax.f32 %v323, 0.0
    %v346 = vmax.f32 %v328, 0.0
    %v347 = vmax.f32 %v331, 0.0
    %v348 = vmax.f32 %v336, 0.0
    %v349 = vmax.f32 %v339, 0.0
    %v350 = vpack.c.bf16 %v343, %v342
    %v351 = vpack.c.bf16 %v345, %v344
    %v352 = vpack.c.bf16 %v347, %v346
    %v353 = vpack.c.bf16 %v349, %v348
    %v354 = vld [vmem:[%s3] sm:$0xf]
    %v355 = vld [vmem:[%s4] sm:$0xff]
    %357 = vset.pattern.permute.xlu0 2
    %358 = vperm.xlu0 %357, %v355
    %v359 = vpop.permute.xlu0 %358
    %v362 = vsel %vm264, %v354, 0
    %364 = vmatprep.subr.bf16.mxu0 0
    %365 = vmatpush1.bf16.msra.mxu0 0
    %366 = vmatprep.subr.bf16.mxu0 0
    %367 = vmatpush1.bf16.msra.mxu0 0
    %368 = vmatprep.subr.bf16.mxu0 0
    %369 = vmatpush1.bf16.msra.mxu0 0
    %370 = vmatprep.subr.bf16.mxu0 0
    %371 = vmatpush1.bf16.msra.mxu0 0
    %372 = vmatprep.subr.bf16.mxu0 0
    %373 = vmatpush1.bf16.msra.mxu0 %v353
    %374 = vmatprep.subr.bf16.mxu0 0
    %375 = vmatpush1.bf16.msra.mxu0 %v352
    %376 = vmatprep.subr.bf16.mxu0 0
    %377 = vmatpush1.bf16.msra.mxu0 %v351
    %378 = vmatprep.subr.bf16.mxu0 0
    %379 = vmatpush1.bf16.msra.mxu0 %v350
    %380 = vmatprep.subr.bf16.mxu0 0
    %381 = vmatpush2.bf16.msra.mxu0 0
    %382 = vmatprep.subr.bf16.mxu0 0
    %383 = vmatpush2.bf16.msra.mxu0 0
    %384 = vmatprep.subr.bf16.mxu0 0
    %385 = vmatpush2.bf16.msra.mxu0 0
    %386 = vmatprep.subr.bf16.mxu0 0
    %387 = vmatpush2.bf16.msra.mxu0 0
    %388 = vmatprep.subr.bf16.mxu0 0
    %389 = vmatpush2.bf16.msra.mxu0 0
    %390 = vmatprep.subr.bf16.mxu0 0
    %391 = vmatpush2.bf16.msra.mxu0 0
    %392 = vmatprep.subr.bf16.mxu0 0
    %393 = vmatpush2.bf16.msra.mxu0 0
    %394 = vmatprep.subr.bf16.mxu0 0
    %395 = vmatpush2.bf16.msra.mxu0 0
    %396 = vmatprep.mubr.bf16.mxu0 0
    %397 = vmatmul.mubr.bf16.gmra.mxu0 %v362
    %v398 = vpop.f32.mrf.mxu0
    %v399 = vadd.f32 %v359, %v398
    %v400 = vpop.f32.mrf.mxu0
    %v401 = vpop.f32.mrf.mxu0
    %v402 = vpop.f32.mrf.mxu0
    %403 = vdwg.mxu0
    %404 = vst [vmem:[#allocation2] sm:$0xff] %v399
    // Predicated region
    $region22: #{tpu_custom_call.1} parent=1 // pred_check
      _
    $region23: #{tpu_custom_call.1} parent=1 // pred_check_branch
      %406 = sbr.rel (0) target = $region25
    $region24: #{tpu_custom_call.1} parent=1 // pred_region
      %s408 = ssub.s32 128, 128
      %409 = vsyncadd [#allocation3], %s408
      %s411 = sshll.u32 [#allocation2], 4
      %s412 = int_to_ptr.vmem [resolvable:$true] %s411
      %414 = dma.vmem_to_hbm [thread:$0]  %s412, 128, %s5, [#allocation3]
    $region25: #{tpu_custom_call.1} parent=1 // pred_fallthru
      _
    // Predicated region
    $region26: #{tpu_custom_call.1} parent=1 // pred_check
      _
    $region27: #{tpu_custom_call.1} parent=1 // pred_check_branch
      %416 = sbr.rel (0) target = $region29
    $region28: #{tpu_custom_call.1} parent=1 // pred_region
      %417 = dma.done [#allocation3], 128
    $region29: #{tpu_custom_call.1} parent=1 // pred_fallthru
      _
    %418 = vsyncpa [#allocation3], 1

</llo_original>
